<compile_context>
chip_gen: v6e
topology: v6e:2x2x1
jax: 0.10.0
libtpu: 0.0.40
codegen_flags: <defaults>
</compile_context>

<pallas_src>
import functools

import jax
import jax.numpy as jnp
import numpy as np
from jax.experimental import pallas as pl
from jax.experimental.pallas import tpu as pltpu


def _e2e_kernel(x1_ref, x2_ref, w1_ref, b1_ref, w2_ref, b2_ref, o_ref, *,
                tn, d, p):
    # x1_ref, x2_ref : (TN, d, C*d)
    # w1_ref, w2_ref : (C*d, P)
    # b1_ref, b2_ref : (1, P)
    # o_ref          : (TN, d, d*P)
    m = tn * d

    # Fold the batch tile into the matmul M dimension: one fused MXU matmul per
    # contraction view (leading-dim merge only; lane dim C*d untouched).
    x1 = x1_ref[...].reshape(m, -1)                       # (TN*d, C*d)
    x2 = x2_ref[...].reshape(m, -1)                       # (TN*d, C*d)

    # a[n*d+i, p] = conv1 output for row i of sample n   (kernel (1, d))
    a = jnp.dot(x1, w1_ref[...],
                preferred_element_type=jnp.float32) + b1_ref[...]   # (TN*d, P)
    # b[n*d+j, p] = conv2 output for column j of sample n (kernel (d, 1))
    b = jnp.dot(x2, w2_ref[...],
                preferred_element_type=jnp.float32) + b2_ref[...]   # (TN*d, P)

    # The d-fold concats of the PyTorch module are just broadcasts:
    #   out[n, i, j*P + p] = a[n*d+i, p] + b[n*d+j, p]
    # No transposes: a/b keep P on the lane axis; the final merge packs the
    # result into a lane-dense (d*P) last dim for unmasked stores.
    out4 = a.reshape(tn, d, 1, p) + b.reshape(tn, 1, d, p)   # (TN, d, d, P)
    o_ref[...] = out4.reshape(tn, d, d * p).astype(o_ref.dtype)


def _pick_batch_tile(n, d, cd, p, in_bytes, out_bytes,
                     target_rows=512, vmem_budget=48 << 20):
    """Pick the batch tile TN (a divisor of N) such that:
       - the folded matmul M = TN*d stays <= target_rows (MXU sweet spot),
       - double-buffered x1/x2/out blocks fit a conservative cross-generation
         VMEM budget (safe on v7x's 64 MiB as well as v5e/v6e),
       - at least 2 grid steps remain when N >= 2 (v7x has 2 TensorCores)."""
    weight_bytes = 2 * cd * p * in_bytes + 2 * p * 4
    best = 1
    for tn in range(1, n + 1):
        if n % tn:
            continue
        if tn * d > target_rows:
            continue
        blocks = 2 * tn * d * cd * in_bytes + tn * d * d * p * out_bytes
        if 2 * blocks + 2 * weight_bytes > vmem_budget:
            continue
        if n >= 2 and n // tn < 2:
            continue
        best = tn
    return best


def e2e_block(x, w1, b1, w2, b2, *, batch_tile=None, compute_dtype=None):
    """x: [N, C, d, d] (NCHW); w1: [P, C, 1, d]; w2: [P, C, d, 1]; b1,b2: [P].

    compute_dtype: optionally jnp.bfloat16 on v6e/v7x (f32 accumulation kept).
    """
    N, C, d, d2 = x.shape
    assert d == d2, "E2EBlock expects square d x d connectivity matrices"
    P = w1.shape[0]
    CD = C * d

    in_dtype = x.dtype if compute_dtype is None else compute_dtype
    out_dtype = x.dtype

    # ---- wrapper-side layout plumbing (keeps the kernel transpose-free) ----
    x1 = jnp.transpose(x, (0, 2, 1, 3)).reshape(N, d, CD).astype(in_dtype)  # row view
    x2 = jnp.transpose(x, (0, 3, 1, 2)).reshape(N, d, CD).astype(in_dtype)  # col view
    w1r = w1.reshape(P, CD).T.astype(in_dtype)            # (C*d, P)
    w2r = w2.reshape(P, CD).T.astype(in_dtype)            # (C*d, P)
    b1r = b1.reshape(1, P).astype(jnp.float32)
    b2r = b2.reshape(1, P).astype(jnp.float32)
    # TODO(synk): x is shipped twice (row + column views). If input HBM traffic
    # ever dominates (P <~ 2C), DMA one view and derive the other in-kernel.

    in_bytes = jnp.dtype(in_dtype).itemsize
    out_bytes = jnp.dtype(out_dtype).itemsize

    TN = (_pick_batch_tile(N, d, CD, P, in_bytes, out_bytes)
          if batch_tile is None else batch_tile)
    assert N % TN == 0, "batch_tile must divide N"

    # VMEM accounting (double-buffered blocks); raise the scoped limit only
    # when the default 32 MiB would not cover it.
    blocks = 2 * TN * d * CD * in_bytes + TN * d * d * P * out_bytes
    weights = 2 * CD * P * in_bytes + 2 * P * 4
    need = 2 * blocks + 2 * weights + (1 << 20)
    vmem_limit = int(min(need * 5 // 4, 100 << 20)) if need > (32 << 20) else None

    kernel = functools.partial(_e2e_kernel, tn=TN, d=d, p=P)

    grid_spec = pltpu.PrefetchScalarGridSpec(
        num_scalar_prefetch=0,
        grid=(N // TN,),
        in_specs=[
            pl.BlockSpec((TN, d, CD), lambda n: (n, 0, 0)),
            pl.BlockSpec((TN, d, CD), lambda n: (n, 0, 0)),
            pl.BlockSpec((CD, P), lambda n: (0, 0)),
            pl.BlockSpec((1, P), lambda n: (0, 0)),
            pl.BlockSpec((CD, P), lambda n: (0, 0)),
            pl.BlockSpec((1, P), lambda n: (0, 0)),
        ],
        out_specs=pl.BlockSpec((TN, d, d * P), lambda n: (n, 0, 0)),
    )

    out_flat = pl.pallas_call(
        kernel,
        out_shape=jax.ShapeDtypeStruct((N, d, d * P), out_dtype),
        grid_spec=grid_spec,
        compiler_params=pltpu.CompilerParams(
            dimension_semantics=("parallel",),
            vmem_limit_bytes=vmem_limit),
    )(x1, x2, w1r, b1r, w2r, b2r)

    # (N, d, d*P) -> (N, d, d, P) -> NCHW (N, P, d, d): pure layout plumbing.
    return jnp.transpose(out_flat.reshape(N, d, d, P), (0, 3, 1, 2))


def e2e_block_reference(x, w1, b1, w2, b2):
    """Pure-JAX reference mirroring the PyTorch forward."""
    a = jnp.einsum('ncij,pcj->npi', x, w1[:, :, 0, :]) + b1[None, :, None]
    b = jnp.einsum('ncij,pci->npj', x, w2[:, :, :, 0]) + b2[None, :, None]
    return a[:, :, :, None] + b[:, :, None, :]


if __name__ == "__main__":
    # Small shapes consistent with the module: E2EBlock(in_planes=4, planes=8, roi_num=16)
    # (At this toy size the op is grid-overhead dominated; the tiling machinery
    #  pays off at BrainNetCNN-scale roi_num ~ 100-400.)
    N, C, P, d = 2, 4, 8, 16

    key = jax.random.PRNGKey(0)
    kx, kw1, kb1, kw2, kb2 = jax.random.split(key, 5)

    x = jax.random.normal(kx, (N, C, d, d), dtype=jnp.float32)

    # Deterministic, PyTorch-Conv2d-like uniform init: U(-bound, bound), bound = 1/sqrt(fan_in)
    fan_in = C * d
    bound = 1.0 / np.sqrt(fan_in)
    w1 = jax.random.uniform(kw1, (P, C, 1, d), jnp.float32, -bound, bound)
    b1 = jax.random.uniform(kb1, (P,), jnp.float32, -bound, bound)
    w2 = jax.random.uniform(kw2, (P, C, d, 1), jnp.float32, -bound, bound)
    b2 = jax.random.uniform(kb2, (P,), jnp.float32, -bound, bound)

    out = jax.block_until_ready(e2e_block(x, w1, b1, w2, b2))
    ref = jax.block_until_ready(e2e_block_reference(x, w1, b1, w2, b2))

    np.testing.assert_allclose(np.asarray(out), np.asarray(ref), rtol=1e-5, atol=1e-5)
    assert out.shape == (N, P, d, d)
    print("KERNEL_OK")
</pallas_src>

<mosaic_0001>
module attributes {stable_mosaic.version = 11 : i64} {
  func.func @_e2e_kernel(%arg0: i32, %arg1: memref<1x16x64xf32, #tpu.memory_space<vmem>>, %arg2: memref<1x16x64xf32, #tpu.memory_space<vmem>>, %arg3: memref<64x8xf32, #tpu.memory_space<vmem>>, %arg4: memref<1x8xf32, #tpu.memory_space<vmem>>, %arg5: memref<64x8xf32, #tpu.memory_space<vmem>>, %arg6: memref<1x8xf32, #tpu.memory_space<vmem>>, %arg7: memref<1x16x128xf32, #tpu.memory_space<vmem>>) attributes {dimension_semantics = [#tpu.dimension_semantics<parallel>], iteration_bounds = array<i64: 2>, scalar_prefetch = 0 : i64, scratch_operands = 0 : i64, tpu.core_type = #tpu.core_type<tc>, window_params = [{transform_indices = @transform_0, window_bounds = array<i64: 1, 16, 64>}, {transform_indices = @transform_1, window_bounds = array<i64: 1, 16, 64>}, {pipeline_mode = #tpu.pipeline_mode<synchronous>, transform_indices = @transform_2, window_bounds = array<i64: 64, 8>}, {pipeline_mode = #tpu.pipeline_mode<synchronous>, transform_indices = @transform_3, window_bounds = array<i64: 1, 8>}, {pipeline_mode = #tpu.pipeline_mode<synchronous>, transform_indices = @transform_4, window_bounds = array<i64: 64, 8>}, {pipeline_mode = #tpu.pipeline_mode<synchronous>, transform_indices = @transform_5, window_bounds = array<i64: 1, 8>}, {transform_indices = @transform_6, window_bounds = array<i64: 1, 16, 128>}]} {
    %c0 = arith.constant 0 : index
    %c0_0 = arith.constant 0 : index
    %c0_1 = arith.constant 0 : index
    %0 = vector.load %arg1[%c0, %c0_0, %c0_1] : memref<1x16x64xf32, #tpu.memory_space<vmem>>, vector<1x16x64xf32>
    %1 = vector.shape_cast %0 : vector<1x16x64xf32> to vector<16x64xf32>
    %c0_2 = arith.constant 0 : index
    %c0_3 = arith.constant 0 : index
    %c0_4 = arith.constant 0 : index
    %2 = vector.load %arg2[%c0_2, %c0_3, %c0_4] : memref<1x16x64xf32, #tpu.memory_space<vmem>>, vector<1x16x64xf32>
    %3 = vector.shape_cast %2 : vector<1x16x64xf32> to vector<16x64xf32>
    %c0_5 = arith.constant 0 : index
    %c0_6 = arith.constant 0 : index
    %4 = vector.load %arg3[%c0_5, %c0_6] : memref<64x8xf32, #tpu.memory_space<vmem>>, vector<64x8xf32>
    %cst = arith.constant dense<0.000000e+00> : vector<16x8xf32>
    %5 = tpu.matmul %1, %4, %cst {dimension_numbers = #tpu.dot_dimension_numbers<[1], [0], [0], [1], [0, 0, 1, 1], [], []>} : vector<16x64xf32>, vector<64x8xf32>, vector<16x8xf32> -> vector<16x8xf32>
    %c0_7 = arith.constant 0 : index
    %c0_8 = arith.constant 0 : index
    %6 = vector.load %arg4[%c0_7, %c0_8] : memref<1x8xf32, #tpu.memory_space<vmem>>, vector<1x8xf32>
    %7 = vector.broadcast %6 : vector<1x8xf32> to vector<16x8xf32>
    %8 = arith.addf %5, %7 : vector<16x8xf32>
    %c0_9 = arith.constant 0 : index
    %c0_10 = arith.constant 0 : index
    %9 = vector.load %arg5[%c0_9, %c0_10] : memref<64x8xf32, #tpu.memory_space<vmem>>, vector<64x8xf32>
    %cst_11 = arith.constant dense<0.000000e+00> : vector<16x8xf32>
    %10 = tpu.matmul %3, %9, %cst_11 {dimension_numbers = #tpu.dot_dimension_numbers<[1], [0], [0], [1], [0, 0, 1, 1], [], []>} : vector<16x64xf32>, vector<64x8xf32>, vector<16x8xf32> -> vector<16x8xf32>
    %c0_12 = arith.constant 0 : index
    %c0_13 = arith.constant 0 : index
    %11 = vector.load %arg6[%c0_12, %c0_13] : memref<1x8xf32, #tpu.memory_space<vmem>>, vector<1x8xf32>
    %12 = vector.broadcast %11 : vector<1x8xf32> to vector<16x8xf32>
    %13 = arith.addf %10, %12 : vector<16x8xf32>
    %14 = vector.shape_cast %8 : vector<16x8xf32> to vector<1x16x1x8xf32>
    %15 = vector.shape_cast %13 : vector<16x8xf32> to vector<1x1x16x8xf32>
    %16 = vector.broadcast %14 : vector<1x16x1x8xf32> to vector<1x16x16x8xf32>
    %17 = vector.broadcast %15 : vector<1x1x16x8xf32> to vector<1x16x16x8xf32>
    %18 = arith.addf %16, %17 : vector<1x16x16x8xf32>
    %19 = vector.shape_cast %18 : vector<1x16x16x8xf32> to vector<1x16x128xf32>
    %c0_14 = arith.constant 0 : index
    %c0_15 = arith.constant 0 : index
    %c0_16 = arith.constant 0 : index
    %20 = vector.load %arg7[%c0_14, %c0_15, %c0_16] : memref<1x16x128xf32, #tpu.memory_space<vmem>>, vector<1x16x128xf32>
    tpu.vector_store %arg7[%c0_14, %c0_15, %c0_16], %19 {strides = array<i32>} : memref<1x16x128xf32, #tpu.memory_space<vmem>>, vector<1x16x128xf32>,
    return
  }
  func.func @transform_0(%arg0: i32) -> (i32, i32, i32) {
    %c0_i32 = arith.constant 0 : i32
    %c0_i32_0 = arith.constant 0 : i32
    %c0_i32_1 = arith.constant 0 : i32
    return %arg0, %c0_i32, %c0_i32_0 : i32, i32, i32
  }
  func.func @transform_1(%arg0: i32) -> (i32, i32, i32) {
    %c0_i32 = arith.constant 0 : i32
    %c0_i32_0 = arith.constant 0 : i32
    %c0_i32_1 = arith.constant 0 : i32
    return %arg0, %c0_i32, %c0_i32_0 : i32, i32, i32
  }
  func.func @transform_2(%arg0: i32) -> (i32, i32) {
    %c0_i32 = arith.constant 0 : i32
    %c0_i32_0 = arith.constant 0 : i32
    %c0_i32_1 = arith.constant 0 : i32
    return %c0_i32, %c0_i32_0 : i32, i32
  }
  func.func @transform_3(%arg0: i32) -> (i32, i32) {
    %c0_i32 = arith.constant 0 : i32
    %c0_i32_0 = arith.constant 0 : i32
    %c0_i32_1 = arith.constant 0 : i32
    return %c0_i32, %c0_i32_0 : i32, i32
  }
  func.func @transform_4(%arg0: i32) -> (i32, i32) {
    %c0_i32 = arith.constant 0 : i32
    %c0_i32_0 = arith.constant 0 : i32
    %c0_i32_1 = arith.constant 0 : i32
    return %c0_i32, %c0_i32_0 : i32, i32
  }
  func.func @transform_5(%arg0: i32) -> (i32, i32) {
    %c0_i32 = arith.constant 0 : i32
    %c0_i32_0 = arith.constant 0 : i32
    %c0_i32_1 = arith.constant 0 : i32
    return %c0_i32, %c0_i32_0 : i32, i32
  }
  func.func @transform_6(%arg0: i32) -> (i32, i32, i32) {
    %c0_i32 = arith.constant 0 : i32
    %c0_i32_0 = arith.constant 0 : i32
    %c0_i32_1 = arith.constant 0 : i32
    return %arg0, %c0_i32, %c0_i32_0 : i32, i32, i32
  }
}

</mosaic_0001>

<llo_original>
// kernel: tpu_custom_call.1
$region0: #{tpu_custom_call.1}
  #allocation0 [shape = 'u32[]', space=smem, size = 0x4, offset = 0x4, fixed_abs, tag = 'smem constant byte address 0x4 - core index']
  #allocation1 [shape = 'u32[144,128]{1,0:T(1,128)}', space=vmem, size = 0x12000, scoped, tag = 'internal scratch']
  %s0 = inlined_call_operand.vmem [shape: f32[2,16,64], index: 0, kind: input, shape index: {}]
  %s1 = inlined_call_operand.vmem [shape: f32[2,16,64], index: 1, kind: input, shape index: {}]
  %s2 = inlined_call_operand.vmem [shape: f32[64,8], index: 2, kind: input, shape index: {}]
  %s3 = inlined_call_operand.vmem [shape: f32[1,8], index: 3, kind: input, shape index: {}]
  %s4 = inlined_call_operand.vmem [shape: f32[64,8], index: 4, kind: input, shape index: {}]
  %s5 = inlined_call_operand.vmem [shape: f32[1,8], index: 5, kind: input, shape index: {}]
  %s6 = inlined_call_operand.hbm [shape: f32[2,16,128], index: 6, kind: output, shape index: {}]
  %s7 = sld [smem:[#allocation0]]
  $region57: #{tpu_custom_call.1} parent=0
    _
  %s9 = ssub.s32 1, %s7
  %s10 = scalar_select 0, %s9, %s7
  $region1: #{tpu_custom_call.1} parent=0
    #allocation2 [shape = 'u8[16384]{0}', space=vmem, size = 0x4000, scoped, tag = 'output window, operand 0']
    #allocation3 [shape = 's32[2]{0}', space=sflag, size = 0x8, scoped, tag = 'scoped memory for tpu_custom_call.1']
    %11 = vsyncpa [#allocation3], 0
    %s12 = scalar_lea.sflag [#allocation3], 1
    %13 = vsyncpa %s12, 0
    loop: start=0, step=1, limit=4
    $region2: #{tpu_custom_call.1} parent=1 // loop_pre_header
      _
    $region3: #{tpu_custom_call.1} parent=1 // loop_header
      %s15 = sphi 0, %s19
      %p16 = scmp.ge.s32.totalorder %s15, 4
      %s25 = sphi 0, %s27
      %s28 = sphi 0, %s25
      %s29 = sphi 0, %s28
      %s45 = sphi 0, %s29
      %s51 = sphi 0, %s53
      %s54 = sphi 0, %s51
      %s55 = sphi 0, %s54
      %s71 = sphi 0, %s55
      %s75 = sphi 0, %s75
      %s77 = sphi 0, %s75
      %s78 = sphi 0, %s77
      %s92 = sphi 0, %s78
      %s96 = sphi 0, %s96
      %s98 = sphi 0, %s96
      %s99 = sphi 0, %s98
      %s113 = sphi 0, %s99
      %s117 = sphi 0, %s117
      %s119 = sphi 0, %s117
      %s120 = sphi 0, %s119
      %s134 = sphi 0, %s120
      %s138 = sphi 0, %s138
      %s140 = sphi 0, %s138
      %s141 = sphi 0, %s140
      %s155 = sphi 0, %s141
      %s161 = sphi 0, %s163
      %s164 = sphi 0, %s161
      %s165 = sphi 0, %s164
      %s181 = sphi 0, %s165
    $region4: #{tpu_custom_call.1} parent=1 // loop_header_branch
      %18 = sbr.rel (%p16) target = $region8
    $region5: #{tpu_custom_call.1} parent=1 // loop_body
      %s20 = ssub.s32 %s15, 1
      %s21 = ssub.s32 %s15, 2
      %s22 = sadd.s32 %s15, 1
      %s23 = ssub.s32 %s15, %s22
      %p24 = scmp.eq.s32.totalorder %s23, 0
      %s26 = sadd.s32 %s25, 1
      %s27 = scalar_select %p24, %s25, %s26
      %p30 = pneg %p24
      %p31 = scmp.eq.s32.totalorder %s15, 1
      %p32 = por %p30, %p31
      %p33 = scmp.ne.s32.totalorder %s25, %s28
      %p34 = scmp.eq.s32.totalorder %s15, 0
      %p35 = por %p33, %p34
      %p36 = scmp.ne.s32.totalorder %s25, %s28
      %p37 = scmp.eq.s32.totalorder %s20, 1
      %p38 = por %p36, %p37
      %p39 = scmp.ne.s32.totalorder %s28, %s29
      %p40 = scmp.eq.s32.totalorder %s20, 0
      %p41 = por %p39, %p40
      %p42 = scmp.ne.s32.totalorder %s28, %s29
      %p43 = scmp.eq.s32.totalorder %s21, 1
      %p44 = por %p42, %p43
      %p46 = scmp.ne.s32.totalorder %s29, %s45
      %p47 = scmp.eq.s32.totalorder %s21, 0
      %p48 = por %p46, %p47
      %s49 = ssub.s32 %s15, %s22
      %p50 = scmp.eq.s32.totalorder %s49, 0
      %s52 = sadd.s32 %s51, 1
      %s53 = scalar_select %p50, %s51, %s52
      %p56 = pneg %p50
      %p57 = scmp.eq.s32.totalorder %s15, 1
      %p58 = por %p56, %p57
      %p59 = scmp.ne.s32.totalorder %s51, %s54
      %p60 = scmp.eq.s32.totalorder %s15, 0
      %p61 = por %p59, %p60
      %p62 = scmp.ne.s32.totalorder %s51, %s54
      %p63 = scmp.eq.s32.totalorder %s20, 1
      %p64 = por %p62, %p63
      %p65 = scmp.ne.s32.totalorder %s54, %s55
      %p66 = scmp.eq.s32.totalorder %s20, 0
      %p67 = por %p65, %p66
      %p68 = scmp.ne.s32.totalorder %s54, %s55
      %p69 = scmp.eq.s32.totalorder %s21, 1
      %p70 = por %p68, %p69
      %p72 = scmp.ne.s32.totalorder %s55, %s71
      %p73 = scmp.eq.s32.totalorder %s21, 0
      %p74 = por %p72, %p73
      %s76 = sadd.s32 %s75, 1
      %p79 = scmp.eq.s32.totalorder %s15, 1
      %p80 = scmp.ne.s32.totalorder %s75, %s77
      %p81 = scmp.eq.s32.totalorder %s15, 0
      %p82 = por %p80, %p81
      %p83 = scmp.ne.s32.totalorder %s75, %s77
      %p84 = scmp.eq.s32.totalorder %s20, 1
      %p85 = por %p83, %p84
      %p86 = scmp.ne.s32.totalorder %s77, %s78
      %p87 = scmp.eq.s32.totalorder %s20, 0
      %p88 = por %p86, %p87
      %p89 = scmp.ne.s32.totalorder %s77, %s78
      %p90 = scmp.eq.s32.totalorder %s21, 1
      %p91 = por %p89, %p90
      %p93 = scmp.ne.s32.totalorder %s78, %s92
      %p94 = scmp.eq.s32.totalorder %s21, 0
      %p95 = por %p93, %p94
      %s97 = sadd.s32 %s96, 1
      %p100 = scmp.eq.s32.totalorder %s15, 1
      %p101 = scmp.ne.s32.totalorder %s96, %s98
      %p102 = scmp.eq.s32.totalorder %s15, 0
      %p103 = por %p101, %p102
      %p104 = scmp.ne.s32.totalorder %s96, %s98
      %p105 = scmp.eq.s32.totalorder %s20, 1
      %p106 = por %p104, %p105
      %p107 = scmp.ne.s32.totalorder %s98, %s99
      %p108 = scmp.eq.s32.totalorder %s20, 0
      %p109 = por %p107, %p108
      %p110 = scmp.ne.s32.totalorder %s98, %s99
      %p111 = scmp.eq.s32.totalorder %s21, 1
      %p112 = por %p110, %p111
      %p114 = scmp.ne.s32.totalorder %s99, %s113
      %p115 = scmp.eq.s32.totalorder %s21, 0
      %p116 = por %p114, %p115
      %s118 = sadd.s32 %s117, 1
      %p121 = scmp.eq.s32.totalorder %s15, 1
      %p122 = scmp.ne.s32.totalorder %s117, %s119
      %p123 = scmp.eq.s32.totalorder %s15, 0
      %p124 = por %p122, %p123
      %p125 = scmp.ne.s32.totalorder %s117, %s119
      %p126 = scmp.eq.s32.totalorder %s20, 1
      %p127 = por %p125, %p126
      %p128 = scmp.ne.s32.totalorder %s119, %s120
      %p129 = scmp.eq.s32.totalorder %s20, 0
      %p130 = por %p128, %p129
      %p131 = scmp.ne.s32.totalorder %s119, %s120
      %p132 = scmp.eq.s32.totalorder %s21, 1
      %p133 = por %p131, %p132
      %p135 = scmp.ne.s32.totalorder %s120, %s134
      %p136 = scmp.eq.s32.totalorder %s21, 0
      %p137 = por %p135, %p136
      %s139 = sadd.s32 %s138, 1
      %p142 = scmp.eq.s32.totalorder %s15, 1
      %p143 = scmp.ne.s32.totalorder %s138, %s140
      %p144 = scmp.eq.s32.totalorder %s15, 0
      %p145 = por %p143, %p144
      %p146 = scmp.ne.s32.totalorder %s138, %s140
      %p147 = scmp.eq.s32.totalorder %s20, 1
      %p148 = por %p146, %p147
      %p149 = scmp.ne.s32.totalorder %s140, %s141
      %p150 = scmp.eq.s32.totalorder %s20, 0
      %p151 = por %p149, %p150
      %p152 = scmp.ne.s32.totalorder %s140, %s141
      %p153 = scmp.eq.s32.totalorder %s21, 1
      %p154 = por %p152, %p153
      %p156 = scmp.ne.s32.totalorder %s141, %s155
      %p157 = scmp.eq.s32.totalorder %s21, 0
      %p158 = por %p156, %p157
      %s159 = ssub.s32 %s15, %s22
      %p160 = scmp.eq.s32.totalorder %s159, 0
      %s162 = sadd.s32 %s161, 1
      %s163 = scalar_select %p160, %s161, %s162
      %p166 = pneg %p160
      %p167 = scmp.eq.s32.totalorder %s15, 1
      %p168 = por %p166, %p167
      %p169 = scmp.ne.s32.totalorder %s161, %s164
      %p170 = scmp.eq.s32.totalorder %s15, 0
      %p171 = por %p169, %p170
      %p172 = scmp.ne.s32.totalorder %s161, %s164
      %p173 = scmp.eq.s32.totalorder %s20, 1
      %p174 = por %p172, %p173
      %p175 = scmp.ne.s32.totalorder %s164, %s165
      %p176 = scmp.eq.s32.totalorder %s20, 0
      %p177 = por %p175, %p176
      %p178 = scmp.ne.s32.totalorder %s164, %s165
      %p179 = scmp.eq.s32.totalorder %s21, 1
      %p180 = por %p178, %p179
      %p182 = scmp.ne.s32.totalorder %s165, %s181
      %p183 = scmp.eq.s32.totalorder %s21, 0
      %p184 = por %p182, %p183
      %p185 = scmp.le.s32.totalorder 1, %s15
      %p186 = scmp.lt.s32.totalorder %s15, 3
      %p187 = pnand %p185, %p186
      %p188 = pneg %p187
      // Predicated region
      $region9: #{tpu_custom_call.1} parent=5 // pred_check
        _
      $region10: #{tpu_custom_call.1} parent=5 // pred_check_branch
        %190 = sbr.rel (%p187) target = $region12
      $region11: #{tpu_custom_call.1} parent=5 // pred_region
        %s191 = ssub.s32 %s15, 1
        // Predicated region
        $region13: #{tpu_custom_call.1} parent=11 // pred_check
          %p192 = pneg %p88
        $region14: #{tpu_custom_call.1} parent=11 // pred_check_branch
          %194 = sbr.rel (%p192) target = $region16
        $region15: #{tpu_custom_call.1} parent=11 // pred_region
          _
        $region16: #{tpu_custom_call.1} parent=11 // pred_fallthru
          _
        // Predicated region
        $region17: #{tpu_custom_call.1} parent=11 // pred_check
          %p195 = pneg %p109
        $region18: #{tpu_custom_call.1} parent=11 // pred_check_branch
          %197 = sbr.rel (%p195) target = $region20
        $region19: #{tpu_custom_call.1} parent=11 // pred_region
          _
        $region20: #{tpu_custom_call.1} parent=11 // pred_fallthru
          _
        // Predicated region
        $region21: #{tpu_custom_call.1} parent=11 // pred_check
          %p198 = pneg %p130
        $region22: #{tpu_custom_call.1} parent=11 // pred_check_branch
          %200 = sbr.rel (%p198) target = $region24
        $region23: #{tpu_custom_call.1} parent=11 // pred_region
          _
        $region24: #{tpu_custom_call.1} parent=11 // pred_fallthru
          _
        // Predicated region
        $region25: #{tpu_custom_call.1} parent=11 // pred_check
          %p201 = pneg %p151
        $region26: #{tpu_custom_call.1} parent=11 // pred_check_branch
          %203 = sbr.rel (%p201) target = $region28
        $region27: #{tpu_custom_call.1} parent=11 // pred_region
          _
        $region28: #{tpu_custom_call.1} parent=11 // pred_fallthru
          _
      $region12: #{tpu_custom_call.1} parent=5 // pred_fallthru
        _
      %p204 = scmp.lt.s32.totalorder %s15, 2
      // Predicated region
      $region29: #{tpu_custom_call.1} parent=5 // pred_check
        %p205 = pneg %p204
      $region30: #{tpu_custom_call.1} parent=5 // pred_check_branch
        %207 = sbr.rel (%p205) target = $region32
      $region31: #{tpu_custom_call.1} parent=5 // pred_region
        // Predicated region
        $region33: #{tpu_custom_call.1} parent=31 // pred_check
          %p208 = pneg %p35
        $region34: #{tpu_custom_call.1} parent=31 // pred_check_branch
          %210 = sbr.rel (%p208) target = $region36
        $region35: #{tpu_custom_call.1} parent=31 // pred_region
          %p211 = scmp.lt.s32.totalorder %s15, 1
          %s212 = scalar_select %p211, %s15, 1
          %s213 = smul.addr %s212, 2
          %s214 = smul.addr %s213, 8
          %s215 = scalar_lea.vmem %s0, %s214
        $region36: #{tpu_custom_call.1} parent=31 // pred_fallthru
          _
        // Predicated region
        $region37: #{tpu_custom_call.1} parent=31 // pred_check
          %p216 = pneg %p61
        $region38: #{tpu_custom_call.1} parent=31 // pred_check_branch
          %218 = sbr.rel (%p216) target = $region40
        $region39: #{tpu_custom_call.1} parent=31 // pred_region
          %p219 = scmp.lt.s32.totalorder %s15, 1
          %s220 = scalar_select %p219, %s15, 1
          %s221 = smul.addr %s220, 2
          %s222 = smul.addr %s221, 8
          %s223 = scalar_lea.vmem %s1, %s222
        $region40: #{tpu_custom_call.1} parent=31 // pred_fallthru
          _
      $region32: #{tpu_custom_call.1} parent=5 // pred_fallthru
        _
      %p224 = scmp.le.s32.totalorder 1, %s15
      %p225 = scmp.lt.s32.totalorder %s15, 3
      %p226 = pnand %p224, %p225
      %p227 = pneg %p226
      // Predicated region
      $region41: #{tpu_custom_call.1} parent=5 // pred_check
        _
      $region42: #{tpu_custom_call.1} parent=5 // pred_check_branch
        %229 = sbr.rel (%p226) target = $region44
      $region43: #{tpu_custom_call.1} parent=5 // pred_region
        %s230 = ssub.s32 %s15, 1
        %p231 = scmp.lt.s32.totalorder %s20, 1
        %s232 = scalar_select %p231, %s20, 1
        %s233 = smul.addr %s232, 2
        %s234 = smul.addr %s233, 8
        %s235 = scalar_lea.vmem %s0, %s234
        %p236 = pneg %p41
        %p237 = pneg %p38
        %p238 = scmp.lt.s32.totalorder %s20, 1
        %s239 = scalar_select %p238, %s20, 1
        %s240 = smul.addr %s239, 2
        %s241 = smul.addr %s240, 8
        %s242 = scalar_lea.vmem %s1, %s241
        %p243 = pneg %p67
        %p244 = pneg %p64
        %p245 = pneg %p88
        %p246 = pneg %p85
        %p247 = pneg %p109
        %p248 = pneg %p106
        %p249 = pneg %p130
        %p250 = pneg %p127
        %p251 = pneg %p151
        %p252 = pneg %p148
        %p253 = pneg %p177
        %p254 = pneg %p174
        %s255 = sand.u32 %s164, 1
        %s256 = scalar_lea.sflag [#allocation3], %s255
        %s257 = sand.u32 %s164, 1
        %s258 = smul.addr %s257, 16
        %s259 = scalar_lea.vmem [#allocation2], %s258
        %p260 = scmp.lt.s32.totalorder %s20, 1
        %s261 = scalar_select %p260, %s20, 1
        %s262 = smul.addr %s261, 2
        %s263 = smul.addr %s262, 8
        %s264 = scalar_lea.vmem %s0, %s263
        %p265 = scmp.lt.s32.totalorder %s20, 1
        %s266 = scalar_select %p265, %s20, 1
        %s267 = smul.addr %s266, 2
        %s268 = smul.addr %s267, 8
        %s269 = scalar_lea.vmem %s1, %s268
        %v270 = vld [vmem:[%s264] sm:$0xff]
        %v271 = vld [vmem:[%s264 + $0x8] sm:$0xff]
        %v272 = vld [vmem:[%s269] sm:$0xff]
        %v273 = vld [vmem:[%s269 + $0x8] sm:$0xff]
        %v274 = vld [vmem:[%s2] sm:$0xff]
        %v275 = vld [vmem:[%s2 + $0x8] sm:$0xff]
        %v276 = vld [vmem:[%s2 + $0x10] sm:$0xff]
        %v277 = vld [vmem:[%s2 + $0x18] sm:$0xff]
        %v278 = vld [vmem:[%s2 + $0x20] sm:$0xff]
        %v279 = vld [vmem:[%s2 + $0x28] sm:$0xff]
        %v280 = vld [vmem:[%s2 + $0x30] sm:$0xff]
        %v281 = vld [vmem:[%s2 + $0x38] sm:$0xff]
        %v282 = vld [vmem:[%s3] sm:$0x1]
        %v284 = vlaneseq
        %v285 = vshrl.u32 %v284, 7
        %v286 = vsub.s32 0, %v285
        %v287 = vrot.slane %v282, %v286
        %vm289 = vcmask 523264
        %v291 = vsel %vm289, %v270, 0
        %v294 = vsel %vm289, %v271, 0
        %296 = vmatprep.subr.mxu0 0.0
        %297 = vmatpush1.msra.mxu0 0.0
        %298 = vmatprep.subr.mxu0 0.0
        %299 = vmatpush1.msra.mxu0 0.0
        %300 = vmatprep.subr.mxu0 0.0
        %301 = vmatpush1.msra.mxu0 0.0
        %302 = vmatprep.subr.mxu0 0.0
        %303 = vmatpush1.msra.mxu0 0.0
        %304 = vmatprep.subr.mxu0 0.0
        %305 = vmatpush1.msra.mxu0 0.0
        %306 = vmatprep.subr.mxu0 0.0
        %307 = vmatpush1.msra.mxu0 0.0
        %308 = vmatprep.subr.mxu0 0.0
        %309 = vmatpush1.msra.mxu0 0.0
        %310 = vmatprep.subr.mxu0 0.0
        %311 = vmatpush1.msra.mxu0 0.0
        %312 = vmatprep.subr.mxu0 0.0
        %313 = vmatpush1.msra.mxu0 %v281
        %314 = vmatprep.subr.mxu0 0.0
        %315 = vmatpush1.msra.mxu0 %v280
        %316 = vmatprep.subr.mxu0 0.0
        %317 = vmatpush1.msra.mxu0 %v279
        %318 = vmatprep.subr.mxu0 0.0
        %319 = vmatpush1.msra.mxu0 %v278
        %320 = vmatprep.subr.mxu0 0.0
        %321 = vmatpush1.msra.mxu0 %v277
        %322 = vmatprep.subr.mxu0 0.0
        %323 = vmatpush1.msra.mxu0 %v276
        %324 = vmatprep.subr.mxu0 0.0
        %325 = vmatpush1.msra.mxu0 %v275
        %326 = vmatprep.subr.mxu0 0.0
        %327 = vmatpush1.msra.mxu0 %v274
        %328 = vmatprep.subr.mxu0 0.0
        %329 = vmatpush2.msra.mxu0 0.0
        %330 = vmatprep.subr.mxu0 0.0
        %331 = vmatpush2.msra.mxu0 0.0
        %332 = vmatprep.subr.mxu0 0.0
        %333 = vmatpush2.msra.mxu0 0.0
        %334 = vmatprep.subr.mxu0 0.0
        %335 = vmatpush2.msra.mxu0 0.0
        %336 = vmatprep.subr.mxu0 0.0
        %337 = vmatpush2.msra.mxu0 0.0
        %338 = vmatprep.subr.mxu0 0.0
        %339 = vmatpush2.msra.mxu0 0.0
        %340 = vmatprep.subr.mxu0 0.0
        %341 = vmatpush2.msra.mxu0 0.0
        %342 = vmatprep.subr.mxu0 0.0
        %343 = vmatpush2.msra.mxu0 0.0
        %344 = vmatprep.subr.mxu0 0.0
        %345 = vmatpush2.msra.mxu0 0.0
        %346 = vmatprep.subr.mxu0 0.0
        %347 = vmatpush2.msra.mxu0 0.0
        %348 = vmatprep.subr.mxu0 0.0
        %349 = vmatpush2.msra.mxu0 0.0
        %350 = vmatprep.subr.mxu0 0.0
        %351 = vmatpush2.msra.mxu0 0.0
        %352 = vmatprep.subr.mxu0 0.0
        %353 = vmatpush2.msra.mxu0 0.0
        %354 = vmatprep.subr.mxu0 0.0
        %355 = vmatpush2.msra.mxu0 0.0
        %356 = vmatprep.subr.mxu0 0.0
        %357 = vmatpush2.msra.mxu0 0.0
        %358 = vmatprep.subr.mxu0 0.0
        %359 = vmatpush2.msra.mxu0 0.0
        %360 = vmatprep.mubr.f32.mxu0 0.0
        %361 = vmatmul.mubr.f32.gmra.mxu0 %v291
        %v362 = vpop.f32.mrf.mxu0
        %v363 = vadd.f32 %v287, %v362
        %v364 = vpop.f32.mrf.mxu0
        %365 = vmatprep.mubr.f32.mxu0 0.0
        %366 = vmatmul.mubr.f32.gmra.mxu0 %v294
        %v367 = vpop.f32.mrf.mxu0
        %v368 = vadd.f32 %v287, %v367
        %v369 = vpop.f32.mrf.mxu0
        %370 = vdwg.mxu0
        %v371 = vld [vmem:[%s4] sm:$0xff]
        %v372 = vld [vmem:[%s4 + $0x8] sm:$0xff]
        %v373 = vld [vmem:[%s4 + $0x10] sm:$0xff]
        %v374 = vld [vmem:[%s4 + $0x18] sm:$0xff]
        %v375 = vld [vmem:[%s4 + $0x20] sm:$0xff]
        %v376 = vld [vmem:[%s4 + $0x28] sm:$0xff]
        %v377 = vld [vmem:[%s4 + $0x30] sm:$0xff]
        %v378 = vld [vmem:[%s4 + $0x38] sm:$0xff]
        %v379 = vld [vmem:[%s5] sm:$0x1]
        %v381 = vlaneseq
        %v382 = vshrl.u32 %v381, 7
        %v383 = vsub.s32 0, %v382
        %v384 = vrot.slane %v379, %v383
        %v387 = vsel %vm289, %v272, 0
        %v390 = vsel %vm289, %v273, 0
        %392 = vmatprep.subr.mxu0 0.0
        %393 = vmatpush1.msra.mxu0 0.0
        %394 = vmatprep.subr.mxu0 0.0
        %395 = vmatpush1.msra.mxu0 0.0
        %396 = vmatprep.subr.mxu0 0.0
        %397 = vmatpush1.msra.mxu0 0.0
        %398 = vmatprep.subr.mxu0 0.0
        %399 = vmatpush1.msra.mxu0 0.0
        %400 = vmatprep.subr.mxu0 0.0
        %401 = vmatpush1.msra.mxu0 0.0
        %402 = vmatprep.subr.mxu0 0.0
        %403 = vmatpush1.msra.mxu0 0.0
        %404 = vmatprep.subr.mxu0 0.0
        %405 = vmatpush1.msra.mxu0 0.0
        %406 = vmatprep.subr.mxu0 0.0
        %407 = vmatpush1.msra.mxu0 0.0
        %408 = vmatprep.subr.mxu0 0.0
        %409 = vmatpush1.msra.mxu0 %v378
        %410 = vmatprep.subr.mxu0 0.0
        %411 = vmatpush1.msra.mxu0 %v377
        %412 = vmatprep.subr.mxu0 0.0
        %413 = vmatpush1.msra.mxu0 %v376
        %414 = vmatprep.subr.mxu0 0.0
        %415 = vmatpush1.msra.mxu0 %v375
        %416 = vmatprep.subr.mxu0 0.0
        %417 = vmatpush1.msra.mxu0 %v374
        %418 = vmatprep.subr.mxu0 0.0
        %419 = vmatpush1.msra.mxu0 %v373
        %420 = vmatprep.subr.mxu0 0.0
        %421 = vmatpush1.msra.mxu0 %v372
        %422 = vmatprep.subr.mxu0 0.0
        %423 = vmatpush1.msra.mxu0 %v371
        %424 = vmatprep.subr.mxu0 0.0
        %425 = vmatpush2.msra.mxu0 0.0
        %426 = vmatprep.subr.mxu0 0.0
        %427 = vmatpush2.msra.mxu0 0.0
        %428 = vmatprep.subr.mxu0 0.0
        %429 = vmatpush2.msra.mxu0 0.0
        %430 = vmatprep.subr.mxu0 0.0
        %431 = vmatpush2.msra.mxu0 0.0
        %432 = vmatprep.subr.mxu0 0.0
        %433 = vmatpush2.msra.mxu0 0.0
        %434 = vmatprep.subr.mxu0 0.0
        %435 = vmatpush2.msra.mxu0 0.0
        %436 = vmatprep.subr.mxu0 0.0
        %437 = vmatpush2.msra.mxu0 0.0
        %438 = vmatprep.subr.mxu0 0.0
        %439 = vmatpush2.msra.mxu0 0.0
        %440 = vmatprep.subr.mxu0 0.0
        %441 = vmatpush2.msra.mxu0 0.0
        %442 = vmatprep.subr.mxu0 0.0
        %443 = vmatpush2.msra.mxu0 0.0
        %444 = vmatprep.subr.mxu0 0.0
        %445 = vmatpush2.msra.mxu0 0.0
        %446 = vmatprep.subr.mxu0 0.0
        %447 = vmatpush2.msra.mxu0 0.0
        %448 = vmatprep.subr.mxu0 0.0
        %449 = vmatpush2.msra.mxu0 0.0
        %450 = vmatprep.subr.mxu0 0.0
        %451 = vmatpush2.msra.mxu0 0.0
        %452 = vmatprep.subr.mxu0 0.0
        %453 = vmatpush2.msra.mxu0 0.0
        %454 = vmatprep.subr.mxu0 0.0
        %455 = vmatpush2.msra.mxu0 0.0
        %456 = vmatprep.mubr.f32.mxu0 0.0
        %457 = vmatmul.mubr.f32.gmra.mxu0 %v387
        %v458 = vpop.f32.mrf.mxu0
        %v459 = vadd.f32 %v384, %v458
        %v460 = vpop.f32.mrf.mxu0
        %461 = vmatprep.mubr.f32.mxu0 0.0
        %462 = vmatmul.mubr.f32.gmra.mxu0 %v390
        %v463 = vpop.f32.mrf.mxu0
        %v464 = vadd.f32 %v384, %v463
        %v465 = vpop.f32.mrf.mxu0
        %466 = vdwg.mxu0
        %v469 = vcombine.high %v363, %v363
        %v471 = vunpack.c.l.s4 1966171168
        %v472 = vunpack.c.0.s8 %v471
        %v473 = vlaneseq
        %v474 = vshrl.u32 %v473, 7
        %v475 = vsub.s32 %v472, %v474
        %v476 = vrot.slane %v363, %v475
        %v478 = vunpack.c.l.s4 1966171168
        %v479 = vunpack.c.0.s8 %v478
        %v480 = vlaneseq
        %v481 = vshrl.u32 %v480, 7
        %v482 = vsub.s32 %v479, %v481
        %v483 = vrot.slane %v469, %v482
        %v484 = vcombine.high %v476, %v476
        %v485 = vcombine.high %v483, %v483
        %v487 = vunpack.c.l.s4 1966171168
        %v488 = vunpack.c.0.s8 %v487
        %v489 = vlaneseq
        %v490 = vshrl.u32 %v489, 7
        %v491 = vsub.s32 %v488, %v490
        %v492 = vrot.slane %v476, %v491
        %v494 = vunpack.c.l.s4 1966171168
        %v495 = vunpack.c.0.s8 %v494
        %v496 = vlaneseq
        %v497 = vshrl.u32 %v496, 7
        %v498 = vsub.s32 %v495, %v497
        %v499 = vrot.slane %v483, %v498
        %v501 = vunpack.c.l.s4 1966171168
        %v502 = vunpack.c.0.s8 %v501
        %v503 = vlaneseq
        %v504 = vshrl.u32 %v503, 7
        %v505 = vsub.s32 %v502, %v504
        %v506 = vrot.slane %v484, %v505
        %v508 = vunpack.c.l.s4 1966171168
        %v509 = vunpack.c.0.s8 %v508
        %v510 = vlaneseq
        %v511 = vshrl.u32 %v510, 7
        %v512 = vsub.s32 %v509, %v511
        %v513 = vrot.slane %v485, %v512
        %v514 = vcombine.high %v492, %v492
        %v515 = vcombine.high %v499, %v499
        %v516 = vcombine.high %v506, %v506
        %v517 = vcombine.high %v513, %v513
        %v518 = vcombine.high %v368, %v368
        %v520 = vunpack.c.l.s4 1966171168
        %v521 = vunpack.c.0.s8 %v520
        %v522 = vlaneseq
        %v523 = vshrl.u32 %v522, 7
        %v524 = vsub.s32 %v521, %v523
        %v525 = vrot.slane %v368, %v524
        %v527 = vunpack.c.l.s4 1966171168
        %v528 = vunpack.c.0.s8 %v527
        %v529 = vlaneseq
        %v530 = vshrl.u32 %v529, 7
        %v531 = vsub.s32 %v528, %v530
        %v532 = vrot.slane %v518, %v531
        %v533 = vcombine.high %v525, %v525
        %v534 = vcombine.high %v532, %v532
        %v536 = vunpack.c.l.s4 1966171168
        %v537 = vunpack.c.0.s8 %v536
        %v538 = vlaneseq
        %v539 = vshrl.u32 %v538, 7
        %v540 = vsub.s32 %v537, %v539
        %v541 = vrot.slane %v525, %v540
        %v543 = vunpack.c.l.s4 1966171168
        %v544 = vunpack.c.0.s8 %v543
        %v545 = vlaneseq
        %v546 = vshrl.u32 %v545, 7
        %v547 = vsub.s32 %v544, %v546
        %v548 = vrot.slane %v532, %v547
        %v550 = vunpack.c.l.s4 1966171168
        %v551 = vunpack.c.0.s8 %v550
        %v552 = vlaneseq
        %v553 = vshrl.u32 %v552, 7
        %v554 = vsub.s32 %v551, %v553
        %v555 = vrot.slane %v533, %v554
        %v557 = vunpack.c.l.s4 1966171168
        %v558 = vunpack.c.0.s8 %v557
        %v559 = vlaneseq
        %v560 = vshrl.u32 %v559, 7
        %v561 = vsub.s32 %v558, %v560
        %v562 = vrot.slane %v534, %v561
        %v563 = vcombine.high %v541, %v541
        %v564 = vcombine.high %v548, %v548
        %v565 = vcombine.high %v555, %v555
        %v566 = vcombine.high %v562, %v562
        %v567 = vlaneseq
        %v568 = vshrl.u32 %v567, 7
        %v569 = vsub.s32 0, %v568
        %v570 = vrot.slane %v492, %v569
        %v571 = vlaneseq
        %v572 = vshrl.u32 %v571, 7
        %v573 = vsub.s32 0, %v572
        %v574 = vrot.slane %v506, %v573
        %v575 = vlaneseq
        %v576 = vshrl.u32 %v575, 7
        %v577 = vsub.s32 0, %v576
        %v578 = vrot.slane %v514, %v577
        %v579 = vlaneseq
        %v580 = vshrl.u32 %v579, 7
        %v581 = vsub.s32 0, %v580
        %v582 = vrot.slane %v516, %v581
        %v583 = vlaneseq
        %v584 = vshrl.u32 %v583, 7
        %v585 = vsub.s32 0, %v584
        %v586 = vrot.slane %v499, %v585
        %v587 = vlaneseq
        %v588 = vshrl.u32 %v587, 7
        %v589 = vsub.s32 0, %v588
        %v590 = vrot.slane %v513, %v589
        %v591 = vlaneseq
        %v592 = vshrl.u32 %v591, 7
        %v593 = vsub.s32 0, %v592
        %v594 = vrot.slane %v515, %v593
        %v595 = vlaneseq
        %v596 = vshrl.u32 %v595, 7
        %v597 = vsub.s32 0, %v596
        %v598 = vrot.slane %v517, %v597
        %v599 = vlaneseq
        %v600 = vshrl.u32 %v599, 7
        %v601 = vsub.s32 0, %v600
        %v602 = vrot.slane %v541, %v601
        %v603 = vlaneseq
        %v604 = vshrl.u32 %v603, 7
        %v605 = vsub.s32 0, %v604
        %v606 = vrot.slane %v555, %v605
        %v607 = vlaneseq
        %v608 = vshrl.u32 %v607, 7
        %v609 = vsub.s32 0, %v608
        %v610 = vrot.slane %v563, %v609
        %v611 = vlaneseq
        %v612 = vshrl.u32 %v611, 7
        %v613 = vsub.s32 0, %v612
        %v614 = vrot.slane %v565, %v613
        %v615 = vlaneseq
        %v616 = vshrl.u32 %v615, 7
        %v617 = vsub.s32 0, %v616
        %v618 = vrot.slane %v548, %v617
        %v619 = vlaneseq
        %v620 = vshrl.u32 %v619, 7
        %v621 = vsub.s32 0, %v620
        %v622 = vrot.slane %v562, %v621
        %v623 = vlaneseq
        %v624 = vshrl.u32 %v623, 7
        %v625 = vsub.s32 0, %v624
        %v626 = vrot.slane %v564, %v625
        %v627 = vlaneseq
        %v628 = vshrl.u32 %v627, 7
        %v629 = vsub.s32 0, %v628
        %v630 = vrot.slane %v566, %v629
        %v647 = vadd.f32 %v570, %v459
        %v648 = vadd.f32 %v570, %v464
        %v649 = vadd.f32 %v574, %v459
        %v650 = vadd.f32 %v574, %v464
        %v651 = vadd.f32 %v578, %v459
        %v652 = vadd.f32 %v578, %v464
        %v653 = vadd.f32 %v582, %v459
        %v654 = vadd.f32 %v582, %v464
        %v655 = vadd.f32 %v586, %v459
        %v656 = vadd.f32 %v586, %v464
        %v657 = vadd.f32 %v590, %v459
        %v658 = vadd.f32 %v590, %v464
        %v659 = vadd.f32 %v594, %v459
        %v660 = vadd.f32 %v594, %v464
        %v661 = vadd.f32 %v598, %v459
        %v662 = vadd.f32 %v598, %v464
        %v663 = vadd.f32 %v602, %v459
        %v664 = vadd.f32 %v602, %v464
        %v665 = vadd.f32 %v606, %v459
        %v666 = vadd.f32 %v606, %v464
        %v667 = vadd.f32 %v610, %v459
        %v668 = vadd.f32 %v610, %v464
        %v669 = vadd.f32 %v614, %v459
        %v670 = vadd.f32 %v614, %v464
        %v671 = vadd.f32 %v618, %v459
        %v672 = vadd.f32 %v618, %v464
        %v673 = vadd.f32 %v622, %v459
        %v674 = vadd.f32 %v622, %v464
        %v675 = vadd.f32 %v626, %v459
        %v676 = vadd.f32 %v626, %v464
        %v677 = vadd.f32 %v630, %v459
        %v678 = vadd.f32 %v630, %v464
        %v679 = vcombine.low %v647, %v651
        %v680 = vcombine.high %v647, %v651
        %v682 = vunpack.c.l.s4 1983009808
        %v683 = vunpack.c.0.s8 %v682
        %v684 = vlaneseq
        %v685 = vshrl.u32 %v684, 7
        %v686 = vsub.s32 %v683, %v685
        %v687 = vrot.slane %v679, %v686
        %v689 = vunpack.c.l.s4 1983009808
        %v690 = vunpack.c.0.s8 %v689
        %v691 = vlaneseq
        %v692 = vshrl.u32 %v691, 7
        %v693 = vsub.s32 %v690, %v692
        %v694 = vrot.slane %v680, %v693
        %v695 = vcombine.low %v649, %v653
        %v696 = vcombine.high %v649, %v653
        %v698 = vunpack.c.l.s4 1983009808
        %v699 = vunpack.c.0.s8 %v698
        %v700 = vlaneseq
        %v701 = vshrl.u32 %v700, 7
        %v702 = vsub.s32 %v699, %v701
        %v703 = vrot.slane %v695, %v702
        %v705 = vunpack.c.l.s4 1983009808
        %v706 = vunpack.c.0.s8 %v705
        %v707 = vlaneseq
        %v708 = vshrl.u32 %v707, 7
        %v709 = vsub.s32 %v706, %v708
        %v710 = vrot.slane %v696, %v709
        %v711 = vcombine.low %v655, %v659
        %v712 = vcombine.high %v655, %v659
        %v714 = vunpack.c.l.s4 1983009808
        %v715 = vunpack.c.0.s8 %v714
        %v716 = vlaneseq
        %v717 = vshrl.u32 %v716, 7
        %v718 = vsub.s32 %v715, %v717
        %v719 = vrot.slane %v711, %v718
        %v721 = vunpack.c.l.s4 1983009808
        %v722 = vunpack.c.0.s8 %v721
        %v723 = vlaneseq
        %v724 = vshrl.u32 %v723, 7
        %v725 = vsub.s32 %v722, %v724
        %v726 = vrot.slane %v712, %v725
        %v727 = vcombine.low %v657, %v661
        %v728 = vcombine.high %v657, %v661
        %v730 = vunpack.c.l.s4 1983009808
        %v731 = vunpack.c.0.s8 %v730
        %v732 = vlaneseq
        %v733 = vshrl.u32 %v732, 7
        %v734 = vsub.s32 %v731, %v733
        %v735 = vrot.slane %v727, %v734
        %v737 = vunpack.c.l.s4 1983009808
        %v738 = vunpack.c.0.s8 %v737
        %v739 = vlaneseq
        %v740 = vshrl.u32 %v739, 7
        %v741 = vsub.s32 %v738, %v740
        %v742 = vrot.slane %v728, %v741
        %v743 = vcombine.low %v687, %v703
        %v744 = vcombine.high %v687, %v703
        %v746 = vunpack.c.l.s4 1934713408
        %v747 = vunpack.c.0.s8 %v746
        %v748 = vlaneseq
        %v749 = vshrl.u32 %v748, 7
        %v750 = vsub.s32 %v747, %v749
        %v751 = vrot.slane %v743, %v750
        %v753 = vunpack.c.l.s4 1934713408
        %v754 = vunpack.c.0.s8 %v753
        %v755 = vlaneseq
        %v756 = vshrl.u32 %v755, 7
        %v757 = vsub.s32 %v754, %v756
        %v758 = vrot.slane %v744, %v757
        %v759 = vcombine.low %v694, %v710
        %v760 = vcombine.high %v694, %v710
        %v762 = vunpack.c.l.s4 1934713408
        %v763 = vunpack.c.0.s8 %v762
        %v764 = vlaneseq
        %v765 = vshrl.u32 %v764, 7
        %v766 = vsub.s32 %v763, %v765
        %v767 = vrot.slane %v759, %v766
        %v769 = vunpack.c.l.s4 1934713408
        %v770 = vunpack.c.0.s8 %v769
        %v771 = vlaneseq
        %v772 = vshrl.u32 %v771, 7
        %v773 = vsub.s32 %v770, %v772
        %v774 = vrot.slane %v760, %v773
        %v775 = vcombine.low %v719, %v735
        %v776 = vcombine.high %v719, %v735
        %v778 = vunpack.c.l.s4 1934713408
        %v779 = vunpack.c.0.s8 %v778
        %v780 = vlaneseq
        %v781 = vshrl.u32 %v780, 7
        %v782 = vsub.s32 %v779, %v781
        %v783 = vrot.slane %v775, %v782
        %v785 = vunpack.c.l.s4 1934713408
        %v786 = vunpack.c.0.s8 %v785
        %v787 = vlaneseq
        %v788 = vshrl.u32 %v787, 7
        %v789 = vsub.s32 %v786, %v788
        %v790 = vrot.slane %v776, %v789
        %v791 = vcombine.low %v726, %v742
        %v792 = vcombine.high %v726, %v742
        %v794 = vunpack.c.l.s4 1934713408
        %v795 = vunpack.c.0.s8 %v794
        %v796 = vlaneseq
        %v797 = vshrl.u32 %v796, 7
        %v798 = vsub.s32 %v795, %v797
        %v799 = vrot.slane %v791, %v798
        %v801 = vunpack.c.l.s4 1934713408
        %v802 = vunpack.c.0.s8 %v801
        %v803 = vlaneseq
        %v804 = vshrl.u32 %v803, 7
        %v805 = vsub.s32 %v802, %v804
        %v806 = vrot.slane %v792, %v805
        %v807 = vcombine.low %v751, %v783
        %v808 = vcombine.high %v751, %v783
        %v809 = vcombine.low %v758, %v790
        %v810 = vcombine.high %v758, %v790
        %v811 = vcombine.low %v767, %v799
        %v812 = vcombine.high %v767, %v799
        %v813 = vcombine.low %v774, %v806
        %v814 = vcombine.high %v774, %v806
        %v815 = vcombine.low %v663, %v667
        %v816 = vcombine.high %v663, %v667
        %v818 = vunpack.c.l.s4 1983009808
        %v819 = vunpack.c.0.s8 %v818
        %v820 = vlaneseq
        %v821 = vshrl.u32 %v820, 7
        %v822 = vsub.s32 %v819, %v821
        %v823 = vrot.slane %v815, %v822
        %v825 = vunpack.c.l.s4 1983009808
        %v826 = vunpack.c.0.s8 %v825
        %v827 = vlaneseq
        %v828 = vshrl.u32 %v827, 7
        %v829 = vsub.s32 %v826, %v828
        %v830 = vrot.slane %v816, %v829
        %v831 = vcombine.low %v665, %v669
        %v832 = vcombine.high %v665, %v669
        %v834 = vunpack.c.l.s4 1983009808
        %v835 = vunpack.c.0.s8 %v834
        %v836 = vlaneseq
        %v837 = vshrl.u32 %v836, 7
        %v838 = vsub.s32 %v835, %v837
        %v839 = vrot.slane %v831, %v838
        %v841 = vunpack.c.l.s4 1983009808
        %v842 = vunpack.c.0.s8 %v841
        %v843 = vlaneseq
        %v844 = vshrl.u32 %v843, 7
        %v845 = vsub.s32 %v842, %v844
        %v846 = vrot.slane %v832, %v845
        %v847 = vcombine.low %v671, %v675
        %v848 = vcombine.high %v671, %v675
        %v850 = vunpack.c.l.s4 1983009808
        %v851 = vunpack.c.0.s8 %v850
        %v852 = vlaneseq
        %v853 = vshrl.u32 %v852, 7
        %v854 = vsub.s32 %v851, %v853
        %v855 = vrot.slane %v847, %v854
        %v857 = vunpack.c.l.s4 1983009808
        %v858 = vunpack.c.0.s8 %v857
        %v859 = vlaneseq
        %v860 = vshrl.u32 %v859, 7
        %v861 = vsub.s32 %v858, %v860
        %v862 = vrot.slane %v848, %v861
        %v863 = vcombine.low %v673, %v677
        %v864 = vcombine.high %v673, %v677
        %v866 = vunpack.c.l.s4 1983009808
        %v867 = vunpack.c.0.s8 %v866
        %v868 = vlaneseq
        %v869 = vshrl.u32 %v868, 7
        %v870 = vsub.s32 %v867, %v869
        %v871 = vrot.slane %v863, %v870
        %v873 = vunpack.c.l.s4 1983009808
        %v874 = vunpack.c.0.s8 %v873
        %v875 = vlaneseq
        %v876 = vshrl.u32 %v875, 7
        %v877 = vsub.s32 %v874, %v876
        %v878 = vrot.slane %v864, %v877
        %v879 = vcombine.low %v823, %v839
        %v880 = vcombine.high %v823, %v839
        %v882 = vunpack.c.l.s4 1934713408
        %v883 = vunpack.c.0.s8 %v882
        %v884 = vlaneseq
        %v885 = vshrl.u32 %v884, 7
        %v886 = vsub.s32 %v883, %v885
        %v887 = vrot.slane %v879, %v886
        %v889 = vunpack.c.l.s4 1934713408
        %v890 = vunpack.c.0.s8 %v889
        %v891 = vlaneseq
        %v892 = vshrl.u32 %v891, 7
        %v893 = vsub.s32 %v890, %v892
        %v894 = vrot.slane %v880, %v893
        %v895 = vcombine.low %v830, %v846
        %v896 = vcombine.high %v830, %v846
        %v898 = vunpack.c.l.s4 1934713408
        %v899 = vunpack.c.0.s8 %v898
        %v900 = vlaneseq
        %v901 = vshrl.u32 %v900, 7
        %v902 = vsub.s32 %v899, %v901
        %v903 = vrot.slane %v895, %v902
        %v905 = vunpack.c.l.s4 1934713408
        %v906 = vunpack.c.0.s8 %v905
        %v907 = vlaneseq
        %v908 = vshrl.u32 %v907, 7
        %v909 = vsub.s32 %v906, %v908
        %v910 = vrot.slane %v896, %v909
        %v911 = vcombine.low %v855, %v871
        %v912 = vcombine.high %v855, %v871
        %v914 = vunpack.c.l.s4 1934713408
        %v915 = vunpack.c.0.s8 %v914
        %v916 = vlaneseq
        %v917 = vshrl.u32 %v916, 7
        %v918 = vsub.s32 %v915, %v917
        %v919 = vrot.slane %v911, %v918
        %v921 = vunpack.c.l.s4 1934713408
        %v922 = vunpack.c.0.s8 %v921
        %v923 = vlaneseq
        %v924 = vshrl.u32 %v923, 7
        %v925 = vsub.s32 %v922, %v924
        %v926 = vrot.slane %v912, %v925
        %v927 = vcombine.low %v862, %v878
        %v928 = vcombine.high %v862, %v878
        %v930 = vunpack.c.l.s4 1934713408
        %v931 = vunpack.c.0.s8 %v930
        %v932 = vlaneseq
        %v933 = vshrl.u32 %v932, 7
        %v934 = vsub.s32 %v931, %v933
        %v935 = vrot.slane %v927, %v934
        %v937 = vunpack.c.l.s4 1934713408
        %v938 = vunpack.c.0.s8 %v937
        %v939 = vlaneseq
        %v940 = vshrl.u32 %v939, 7
        %v941 = vsub.s32 %v938, %v940
        %v942 = vrot.slane %v928, %v941
        %v943 = vcombine.low %v887, %v919
        %v944 = vcombine.high %v887, %v919
        %v945 = vcombine.low %v894, %v926
        %v946 = vcombine.high %v894, %v926
        %v947 = vcombine.low %v903, %v935
        %v948 = vcombine.high %v903, %v935
        %v949 = vcombine.low %v910, %v942
        %v950 = vcombine.high %v910, %v942
        %v951 = vcombine.low %v648, %v652
        %v952 = vcombine.high %v648, %v652
        %v954 = vunpack.c.l.s4 1983009808
        %v955 = vunpack.c.0.s8 %v954
        %v956 = vlaneseq
        %v957 = vshrl.u32 %v956, 7
        %v958 = vsub.s32 %v955, %v957
        %v959 = vrot.slane %v951, %v958
        %v961 = vunpack.c.l.s4 1983009808
        %v962 = vunpack.c.0.s8 %v961
        %v963 = vlaneseq
        %v964 = vshrl.u32 %v963, 7
        %v965 = vsub.s32 %v962, %v964
        %v966 = vrot.slane %v952, %v965
        %v967 = vcombine.low %v650, %v654
        %v968 = vcombine.high %v650, %v654
        %v970 = vunpack.c.l.s4 1983009808
        %v971 = vunpack.c.0.s8 %v970
        %v972 = vlaneseq
        %v973 = vshrl.u32 %v972, 7
        %v974 = vsub.s32 %v971, %v973
        %v975 = vrot.slane %v967, %v974
        %v977 = vunpack.c.l.s4 1983009808
        %v978 = vunpack.c.0.s8 %v977
        %v979 = vlaneseq
        %v980 = vshrl.u32 %v979, 7
        %v981 = vsub.s32 %v978, %v980
        %v982 = vrot.slane %v968, %v981
        %v983 = vcombine.low %v656, %v660
        %v984 = vcombine.high %v656, %v660
        %v986 = vunpack.c.l.s4 1983009808
        %v987 = vunpack.c.0.s8 %v986
        %v988 = vlaneseq
        %v989 = vshrl.u32 %v988, 7
        %v990 = vsub.s32 %v987, %v989
        %v991 = vrot.slane %v983, %v990
        %v993 = vunpack.c.l.s4 1983009808
        %v994 = vunpack.c.0.s8 %v993
        %v995 = vlaneseq
        %v996 = vshrl.u32 %v995, 7
        %v997 = vsub.s32 %v994, %v996
        %v998 = vrot.slane %v984, %v997
        %v999 = vcombine.low %v658, %v662
        %v1000 = vcombine.high %v658, %v662
        %v1002 = vunpack.c.l.s4 1983009808
        %v1003 = vunpack.c.0.s8 %v1002
        %v1004 = vlaneseq
        %v1005 = vshrl.u32 %v1004, 7
        %v1006 = vsub.s32 %v1003, %v1005
        %v1007 = vrot.slane %v999, %v1006
        %v1009 = vunpack.c.l.s4 1983009808
        %v1010 = vunpack.c.0.s8 %v1009
        %v1011 = vlaneseq
        %v1012 = vshrl.u32 %v1011, 7
        %v1013 = vsub.s32 %v1010, %v1012
        %v1014 = vrot.slane %v1000, %v1013
        %v1015 = vcombine.low %v959, %v975
        %v1016 = vcombine.high %v959, %v975
        %v1018 = vunpack.c.l.s4 1934713408
        %v1019 = vunpack.c.0.s8 %v1018
        %v1020 = vlaneseq
        %v1021 = vshrl.u32 %v1020, 7
        %v1022 = vsub.s32 %v1019, %v1021
        %v1023 = vrot.slane %v1015, %v1022
        %v1025 = vunpack.c.l.s4 1934713408
        %v1026 = vunpack.c.0.s8 %v1025
        %v1027 = vlaneseq
        %v1028 = vshrl.u32 %v1027, 7
        %v1029 = vsub.s32 %v1026, %v1028
        %v1030 = vrot.slane %v1016, %v1029
        %v1031 = vcombine.low %v966, %v982
        %v1032 = vcombine.high %v966, %v982
        %v1034 = vunpack.c.l.s4 1934713408
        %v1035 = vunpack.c.0.s8 %v1034
        %v1036 = vlaneseq
        %v1037 = vshrl.u32 %v1036, 7
        %v1038 = vsub.s32 %v1035, %v1037
        %v1039 = vrot.slane %v1031, %v1038
        %v1041 = vunpack.c.l.s4 1934713408
        %v1042 = vunpack.c.0.s8 %v1041
        %v1043 = vlaneseq
        %v1044 = vshrl.u32 %v1043, 7
        %v1045 = vsub.s32 %v1042, %v1044
        %v1046 = vrot.slane %v1032, %v1045
        %v1047 = vcombine.low %v991, %v1007
        %v1048 = vcombine.high %v991, %v1007
        %v1050 = vunpack.c.l.s4 1934713408
        %v1051 = vunpack.c.0.s8 %v1050
        %v1052 = vlaneseq
        %v1053 = vshrl.u32 %v1052, 7
        %v1054 = vsub.s32 %v1051, %v1053
        %v1055 = vrot.slane %v1047, %v1054
        %v1057 = vunpack.c.l.s4 1934713408
        %v1058 = vunpack.c.0.s8 %v1057
        %v1059 = vlaneseq
        %v1060 = vshrl.u32 %v1059, 7
        %v1061 = vsub.s32 %v1058, %v1060
        %v1062 = vrot.slane %v1048, %v1061
        %v1063 = vcombine.low %v998, %v1014
        %v1064 = vcombine.high %v998, %v1014
        %v1066 = vunpack.c.l.s4 1934713408
        %v1067 = vunpack.c.0.s8 %v1066
        %v1068 = vlaneseq
        %v1069 = vshrl.u32 %v1068, 7
        %v1070 = vsub.s32 %v1067, %v1069
        %v1071 = vrot.slane %v1063, %v1070
        %v1073 = vunpack.c.l.s4 1934713408
        %v1074 = vunpack.c.0.s8 %v1073
        %v1075 = vlaneseq
        %v1076 = vshrl.u32 %v1075, 7
        %v1077 = vsub.s32 %v1074, %v1076
        %v1078 = vrot.slane %v1064, %v1077
        %v1079 = vcombine.low %v1023, %v1055
        %v1080 = vcombine.high %v1023, %v1055
        %v1081 = vcombine.low %v1030, %v1062
        %v1082 = vcombine.high %v1030, %v1062
        %v1083 = vcombine.low %v1039, %v1071
        %v1084 = vcombine.high %v1039, %v1071
        %v1085 = vcombine.low %v1046, %v1078
        %v1086 = vcombine.high %v1046, %v1078
        %v1087 = vcombine.low %v664, %v668
        %v1088 = vcombine.high %v664, %v668
        %v1090 = vunpack.c.l.s4 1983009808
        %v1091 = vunpack.c.0.s8 %v1090
        %v1092 = vlaneseq
        %v1093 = vshrl.u32 %v1092, 7
        %v1094 = vsub.s32 %v1091, %v1093
        %v1095 = vrot.slane %v1087, %v1094
        %v1097 = vunpack.c.l.s4 1983009808
        %v1098 = vunpack.c.0.s8 %v1097
        %v1099 = vlaneseq
        %v1100 = vshrl.u32 %v1099, 7
        %v1101 = vsub.s32 %v1098, %v1100
        %v1102 = vrot.slane %v1088, %v1101
        %v1103 = vcombine.low %v666, %v670
        %v1104 = vcombine.high %v666, %v670
        %v1106 = vunpack.c.l.s4 1983009808
        %v1107 = vunpack.c.0.s8 %v1106
        %v1108 = vlaneseq
        %v1109 = vshrl.u32 %v1108, 7
        %v1110 = vsub.s32 %v1107, %v1109
        %v1111 = vrot.slane %v1103, %v1110
        %v1113 = vunpack.c.l.s4 1983009808
        %v1114 = vunpack.c.0.s8 %v1113
        %v1115 = vlaneseq
        %v1116 = vshrl.u32 %v1115, 7
        %v1117 = vsub.s32 %v1114, %v1116
        %v1118 = vrot.slane %v1104, %v1117
        %v1119 = vcombine.low %v672, %v676
        %v1120 = vcombine.high %v672, %v676
        %v1122 = vunpack.c.l.s4 1983009808
        %v1123 = vunpack.c.0.s8 %v1122
        %v1124 = vlaneseq
        %v1125 = vshrl.u32 %v1124, 7
        %v1126 = vsub.s32 %v1123, %v1125
        %v1127 = vrot.slane %v1119, %v1126
        %v1129 = vunpack.c.l.s4 1983009808
        %v1130 = vunpack.c.0.s8 %v1129
        %v1131 = vlaneseq
        %v1132 = vshrl.u32 %v1131, 7
        %v1133 = vsub.s32 %v1130, %v1132
        %v1134 = vrot.slane %v1120, %v1133
        %v1135 = vcombine.low %v674, %v678
        %v1136 = vcombine.high %v674, %v678
        %v1138 = vunpack.c.l.s4 1983009808
        %v1139 = vunpack.c.0.s8 %v1138
        %v1140 = vlaneseq
        %v1141 = vshrl.u32 %v1140, 7
        %v1142 = vsub.s32 %v1139, %v1141
        %v1143 = vrot.slane %v1135, %v1142
        %v1145 = vunpack.c.l.s4 1983009808
        %v1146 = vunpack.c.0.s8 %v1145
        %v1147 = vlaneseq
        %v1148 = vshrl.u32 %v1147, 7
        %v1149 = vsub.s32 %v1146, %v1148
        %v1150 = vrot.slane %v1136, %v1149
        %v1151 = vcombine.low %v1095, %v1111
        %v1152 = vcombine.high %v1095, %v1111
        %v1154 = vunpack.c.l.s4 1934713408
        %v1155 = vunpack.c.0.s8 %v1154
        %v1156 = vlaneseq
        %v1157 = vshrl.u32 %v1156, 7
        %v1158 = vsub.s32 %v1155, %v1157
        %v1159 = vrot.slane %v1151, %v1158
        %v1161 = vunpack.c.l.s4 1934713408
        %v1162 = vunpack.c.0.s8 %v1161
        %v1163 = vlaneseq
        %v1164 = vshrl.u32 %v1163, 7
        %v1165 = vsub.s32 %v1162, %v1164
        %v1166 = vrot.slane %v1152, %v1165
        %v1167 = vcombine.low %v1102, %v1118
        %v1168 = vcombine.high %v1102, %v1118
        %v1170 = vunpack.c.l.s4 1934713408
        %v1171 = vunpack.c.0.s8 %v1170
        %v1172 = vlaneseq
        %v1173 = vshrl.u32 %v1172, 7
        %v1174 = vsub.s32 %v1171, %v1173
        %v1175 = vrot.slane %v1167, %v1174
        %v1177 = vunpack.c.l.s4 1934713408
        %v1178 = vunpack.c.0.s8 %v1177
        %v1179 = vlaneseq
        %v1180 = vshrl.u32 %v1179, 7
        %v1181 = vsub.s32 %v1178, %v1180
        %v1182 = vrot.slane %v1168, %v1181
        %v1183 = vcombine.low %v1127, %v1143
        %v1184 = vcombine.high %v1127, %v1143
        %v1186 = vunpack.c.l.s4 1934713408
        %v1187 = vunpack.c.0.s8 %v1186
        %v1188 = vlaneseq
        %v1189 = vshrl.u32 %v1188, 7
        %v1190 = vsub.s32 %v1187, %v1189
        %v1191 = vrot.slane %v1183, %v1190
        %v1193 = vunpack.c.l.s4 1934713408
        %v1194 = vunpack.c.0.s8 %v1193
        %v1195 = vlaneseq
        %v1196 = vshrl.u32 %v1195, 7
        %v1197 = vsub.s32 %v1194, %v1196
        %v1198 = vrot.slane %v1184, %v1197
        %v1199 = vcombine.low %v1134, %v1150
        %v1200 = vcombine.high %v1134, %v1150
        %v1202 = vunpack.c.l.s4 1934713408
        %v1203 = vunpack.c.0.s8 %v1202
        %v1204 = vlaneseq
        %v1205 = vshrl.u32 %v1204, 7
        %v1206 = vsub.s32 %v1203, %v1205
        %v1207 = vrot.slane %v1199, %v1206
        %v1209 = vunpack.c.l.s4 1934713408
        %v1210 = vunpack.c.0.s8 %v1209
        %v1211 = vlaneseq
        %v1212 = vshrl.u32 %v1211, 7
        %v1213 = vsub.s32 %v1210, %v1212
        %v1214 = vrot.slane %v1200, %v1213
        %v1215 = vcombine.low %v1159, %v1191
        %v1216 = vcombine.high %v1159, %v1191
        %v1217 = vcombine.low %v1166, %v1198
        %v1218 = vcombine.high %v1166, %v1198
        %v1219 = vcombine.low %v1175, %v1207
        %v1220 = vcombine.high %v1175, %v1207
        %v1221 = vcombine.low %v1182, %v1214
        %v1222 = vcombine.high %v1182, %v1214
        %1225 = vrot.lane.b32.xlu0 %v808, 8
        %v1226 = vpop.permute.xlu0 %1225
        %1227 = vrot.lane.b32.xlu0 %v944, 8
        %v1228 = vpop.permute.xlu0 %1227
        %1233 = vrot.lane.b32.xlu0 %v809, 16
        %v1234 = vpop.permute.xlu0 %1233
        %1235 = vrot.lane.b32.xlu0 %v945, 16
        %v1236 = vpop.permute.xlu0 %1235
        %1241 = vrot.lane.b32.xlu0 %v810, 24
        %v1242 = vpop.permute.xlu0 %1241
        %1243 = vrot.lane.b32.xlu0 %v946, 24
        %v1244 = vpop.permute.xlu0 %1243
        %1249 = vrot.lane.b32.xlu0 %v811, 32
        %v1250 = vpop.permute.xlu0 %1249
        %1251 = vrot.lane.b32.xlu0 %v947, 32
        %v1252 = vpop.permute.xlu0 %1251
        %1257 = vrot.lane.b32.xlu0 %v812, 40
        %v1258 = vpop.permute.xlu0 %1257
        %1259 = vrot.lane.b32.xlu0 %v948, 40
        %v1260 = vpop.permute.xlu0 %1259
        %1265 = vrot.lane.b32.xlu0 %v813, 48
        %v1266 = vpop.permute.xlu0 %1265
        %1267 = vrot.lane.b32.xlu0 %v949, 48
        %v1268 = vpop.permute.xlu0 %1267
        %1273 = vrot.lane.b32.xlu0 %v814, 56
        %v1274 = vpop.permute.xlu0 %1273
        %1275 = vrot.lane.b32.xlu0 %v950, 56
        %v1276 = vpop.permute.xlu0 %1275
        %1281 = vrot.lane.b32.xlu0 %v1079, 64
        %v1282 = vpop.permute.xlu0 %1281
        %1283 = vrot.lane.b32.xlu0 %v1215, 64
        %v1284 = vpop.permute.xlu0 %1283
        %1289 = vrot.lane.b32.xlu0 %v1080, 72
        %v1290 = vpop.permute.xlu0 %1289
        %1291 = vrot.lane.b32.xlu0 %v1216, 72
        %v1292 = vpop.permute.xlu0 %1291
        %1297 = vrot.lane.b32.xlu0 %v1081, 80
        %v1298 = vpop.permute.xlu0 %1297
        %1299 = vrot.lane.b32.xlu0 %v1217, 80
        %v1300 = vpop.permute.xlu0 %1299
        %1305 = vrot.lane.b32.xlu0 %v1082, 88
        %v1306 = vpop.permute.xlu0 %1305
        %1307 = vrot.lane.b32.xlu0 %v1218, 88
        %v1308 = vpop.permute.xlu0 %1307
        %1313 = vrot.lane.b32.xlu0 %v1083, 96
        %v1314 = vpop.permute.xlu0 %1313
        %1315 = vrot.lane.b32.xlu0 %v1219, 96
        %v1316 = vpop.permute.xlu0 %1315
        %1321 = vrot.lane.b32.xlu0 %v1084, 104
        %v1322 = vpop.permute.xlu0 %1321
        %1323 = vrot.lane.b32.xlu0 %v1220, 104
        %v1324 = vpop.permute.xlu0 %1323
        %1329 = vrot.lane.b32.xlu0 %v1085, 112
        %v1330 = vpop.permute.xlu0 %1329
        %1331 = vrot.lane.b32.xlu0 %v1221, 112
        %v1332 = vpop.permute.xlu0 %1331
        %1337 = vrot.lane.b32.xlu0 %v1086, 120
        %v1338 = vpop.permute.xlu0 %1337
        %1339 = vrot.lane.b32.xlu0 %v1222, 120
        %v1340 = vpop.permute.xlu0 %1339
        %vm1343 = vcmask 64512
        %v1344 = vsel %vm1343, %v807, %v1226
        %v1345 = vsel %vm1343, %v943, %v1228
        %vm1346 = vcmask 130048
        %v1347 = vsel %vm1346, %v1344, %v1234
        %v1348 = vsel %vm1346, %v1345, %v1236
        %vm1349 = vcmask 195584
        %v1350 = vsel %vm1349, %v1347, %v1242
        %v1351 = vsel %vm1349, %v1348, %v1244
        %vm1352 = vcmask 261120
        %v1353 = vsel %vm1352, %v1350, %v1250
        %v1354 = vsel %vm1352, %v1351, %v1252
        %vm1355 = vcmask 326656
        %v1356 = vsel %vm1355, %v1353, %v1258
        %v1357 = vsel %vm1355, %v1354, %v1260
        %vm1358 = vcmask 392192
        %v1359 = vsel %vm1358, %v1356, %v1266
        %v1360 = vsel %vm1358, %v1357, %v1268
        %vm1361 = vcmask 457728
        %v1362 = vsel %vm1361, %v1359, %v1274
        %v1363 = vsel %vm1361, %v1360, %v1276
        %v1364 = vsel %vm289, %v1362, %v1282
        %v1365 = vsel %vm289, %v1363, %v1284
        %vm1366 = vcmask 588800
        %v1367 = vsel %vm1366, %v1364, %v1290
        %v1368 = vsel %vm1366, %v1365, %v1292
        %vm1369 = vcmask 654336
        %v1370 = vsel %vm1369, %v1367, %v1298
        %v1371 = vsel %vm1369, %v1368, %v1300
        %vm1372 = vcmask 719872
        %v1373 = vsel %vm1372, %v1370, %v1306
        %v1374 = vsel %vm1372, %v1371, %v1308
        %vm1375 = vcmask 785408
        %v1376 = vsel %vm1375, %v1373, %v1314
        %v1377 = vsel %vm1375, %v1374, %v1316
        %vm1378 = vcmask 850944
        %v1379 = vsel %vm1378, %v1376, %v1322
        %v1380 = vsel %vm1378, %v1377, %v1324
        %vm1381 = vcmask 916480
        %v1382 = vsel %vm1381, %v1379, %v1330
        %v1383 = vsel %vm1381, %v1380, %v1332
        %vm1384 = vcmask 982016
        %v1385 = vsel %vm1384, %v1382, %v1338
        %v1386 = vsel %vm1384, %v1383, %v1340
        %1387 = vst [vmem:[%s259] sm:$0xff] %v1385
        %1388 = vst [vmem:[%s259 + $0x8] sm:$0xff] %v1386
        %s1389 = sand.u32 %s164, 1
        %s1390 = scalar_lea.sflag [#allocation3], %s1389
        %s1391 = sand.u32 %s164, 1
        %s1392 = smul.addr %s1391, 16
        %s1393 = scalar_lea.vmem [#allocation2], %s1392
        // Predicated region
        $region45: #{tpu_custom_call.1} parent=43 // pred_check
          %p1394 = pneg %p174
        $region46: #{tpu_custom_call.1} parent=43 // pred_check_branch
          %1396 = sbr.rel (%p1394) target = $region48
        $region47: #{tpu_custom_call.1} parent=43 // pred_region
          %s1398 = ssub.s32 256, 256
          %1399 = vsyncadd %s1390, %s1398
          %s1400 = smul.addr %s20, 2
          %s1401 = smul.addr %s1400, 128
          %s1402 = scalar_lea.hbm %s6, %s1401
          %s1403 = sshll.u32 %s1393, 4
          %s1404 = int_to_ptr.vmem [resolvable:$true] %s1403
          %1409 = dma.vmem_to_hbm [thread:$0]  %s1404, 256, %s1402, %s1390, 128, 128, 8
        $region48: #{tpu_custom_call.1} parent=43 // pred_fallthru
          _
      $region44: #{tpu_custom_call.1} parent=5 // pred_fallthru
        _
      %p1410 = scmp.le.s32.totalorder 2, %s15
      // Predicated region
      $region49: #{tpu_custom_call.1} parent=5 // pred_check
        %p1411 = pneg %p1410
      $region50: #{tpu_custom_call.1} parent=5 // pred_check_branch
        %1413 = sbr.rel (%p1411) target = $region52
      $region51: #{tpu_custom_call.1} parent=5 // pred_region
        %s1414 = ssub.s32 %s15, 2
        // Predicated region
        $region53: #{tpu_custom_call.1} parent=51 // pred_check
          %p1415 = pneg %p180
        $region54: #{tpu_custom_call.1} parent=51 // pred_check_branch
          %1417 = sbr.rel (%p1415) target = $region56
        $region55: #{tpu_custom_call.1} parent=51 // pred_region
          %s1418 = sand.u32 %s165, 1
          %s1419 = scalar_lea.sflag [#allocation3], %s1418
          %s1420 = sand.u32 %s165, 1
          %s1421 = smul.addr %s1420, 16
          %s1422 = scalar_lea.vmem [#allocation2], %s1421
          %1423 = dma.done %s1419, 256
        $region56: #{tpu_custom_call.1} parent=51 // pred_fallthru
          _
      $region52: #{tpu_custom_call.1} parent=5 // pred_fallthru
        _
    $region6: #{tpu_custom_call.1} parent=1 // loop_footer
      %s19 = sadd.s32 1, %s15
    $region7: #{tpu_custom_call.1} parent=1 // loop_footer_branch
      %14 = sbr.rel target = $region3
    $region8: #{tpu_custom_call.1} parent=1 // loop_exit
      _
    %1424 = vsyncpa [#allocation3], 1
    %s1425 = scalar_lea.sflag [#allocation3], 1
    %1426 = vsyncpa %s1425, 1

</llo_original>
